<compile_context>
chip_gen: v7x
topology: tpu7x:2x2x1
jax: 0.10.0
libtpu: 0.0.40
codegen_flags: <defaults>
</compile_context>

<pallas_src>
import functools

import jax
import jax.numpy as jnp
from jax.experimental import pallas as pl
from jax.experimental.pallas import tpu as pltpu


def _round_up(x, m):
    return ((x + m - 1) // m) * m


# ----------------------------------------------------------------------------
# Kernel 1: backbone Linear + ReLU  (representation), tiled over (M, K).
# ----------------------------------------------------------------------------
def backbone_kernel(x_ref, w1_ref, b1_ref, rep_ref, acc_ref):
    k = pl.program_id(1)

    @pl.when(k == 0)
    def _():
        acc_ref[...] = jnp.zeros_like(acc_ref)

    # bf16 x bf16 -> f32 accumulation on the MXU.
    acc_ref[...] += jnp.dot(x_ref[...], w1_ref[...],
                            preferred_element_type=jnp.float32)

    @pl.when(k == pl.num_programs(1) - 1)
    def _():
        rep_ref[...] = jnp.maximum(acc_ref[...] + b1_ref[...], 0.0)


# ----------------------------------------------------------------------------
# Kernel 2: projector MLP  Linear -> BatchNorm1d (batch stats) -> ReLU -> Linear.
# Runs on the whole (padded) batch in one block; BN stats use only the real rows.
# ----------------------------------------------------------------------------
def projector_kernel(rep_ref, wp1_ref, wp2_ref, small_ref, proj_ref,
                     *, b_real, ph_pad, ps_pad):
    bp1 = small_ref[0:1, :ph_pad]
    gamma = small_ref[1:2, :ph_pad]
    beta = small_ref[2:3, :ph_pad]
    bp2 = small_ref[3:4, :ps_pad]

    rep = rep_ref[...].astype(jnp.bfloat16)
    h = jnp.dot(rep, wp1_ref[...], preferred_element_type=jnp.float32) + bp1

    # BatchNorm1d training-mode statistics over the REAL batch rows only
    # (padded sublane rows are masked out; biased variance, as torch).
    row_ids = jax.lax.broadcasted_iota(jnp.int32, h.shape, 0)
    valid = (row_ids < b_real).astype(jnp.float32)
    inv_n = 1.0 / float(b_real)
    mu = jnp.sum(h * valid, axis=0, keepdims=True) * inv_n
    var = jnp.sum(jnp.square(h - mu) * valid, axis=0, keepdims=True) * inv_n
    h = (h - mu) * jax.lax.rsqrt(var + 1e-5) * gamma + beta
    h = jnp.maximum(h, 0.0)

    proj_ref[...] = (jnp.dot(h.astype(jnp.bfloat16), wp2_ref[...],
                             preferred_element_type=jnp.float32) + bp2)


# ----------------------------------------------------------------------------
# Wrapper
# ----------------------------------------------------------------------------
def byol_forward(x_nchw, params, *, tk=512, tm_max=256):
    """Returns (projection, representation), matching BYOL.forward."""
    w1, b1, wp1, bp1, gamma, beta, wp2, bp2 = params
    B = x_nchw.shape[0]
    in_dim, feat = w1.shape
    ph = wp1.shape[1]
    ps = wp2.shape[1]

    # --- padded / tiled geometry -------------------------------------------
    Bp = _round_up(B, 8)                    # sublane granule
    tm = tm_max if Bp >= tm_max else Bp
    Bp = _round_up(Bp, tm)
    tk = min(tk, _round_up(in_dim, 128))    # tk is a multiple of 128
    Kp = _round_up(in_dim, tk)
    FEATp = _round_up(feat, 128)
    PHp = _round_up(ph, 128)
    PSp = _round_up(ps, 128)
    padl = max(PHp, PSp)

    # --- pad + pack operands (glue; zero padding is numerically inert) ------
    x_flat = x_nchw.reshape(B, -1).astype(jnp.float32)
    x_pad = jnp.zeros((Bp, Kp), jnp.float32).at[:B, :in_dim].set(x_flat)
    x_pad = x_pad.astype(jnp.bfloat16)                      # bf16 streamed operand
    w1_pad = jnp.zeros((Kp, FEATp), jnp.float32).at[:in_dim, :feat].set(w1)
    w1_pad = w1_pad.astype(jnp.bfloat16)                    # bf16 stored weight
    b1_pad = jnp.zeros((1, FEATp), jnp.float32).at[:, :feat].set(b1)
    wp1_pad = jnp.zeros((FEATp, PHp), jnp.float32).at[:feat, :ph].set(wp1)
    wp1_pad = wp1_pad.astype(jnp.bfloat16)
    wp2_pad = jnp.zeros((PHp, PSp), jnp.float32).at[:ph, :ps].set(wp2)
    wp2_pad = wp2_pad.astype(jnp.bfloat16)

    # Pack the tiny per-feature projector vectors into ONE VMEM operand.
    small = jnp.zeros((4, padl), jnp.float32)
    small = small.at[0, :ph].set(bp1[0])
    small = small.at[1, :ph].set(gamma[0])
    small = small.at[2, :ph].set(beta[0])
    small = small.at[3, :ps].set(bp2[0])

    # --- call 1: backbone matmul, (M, K) grid, f32 accumulator --------------
    rep_pad = pl.pallas_call(
        backbone_kernel,
        out_shape=jax.ShapeDtypeStruct((Bp, FEATp), jnp.float32),
        grid_spec=pltpu.PrefetchScalarGridSpec(
            num_scalar_prefetch=0,
            grid=(Bp // tm, Kp // tk),
            in_specs=[
                pl.BlockSpec((tm, tk), lambda m, k: (m, k)),
                pl.BlockSpec((tk, FEATp), lambda m, k: (k, 0)),
                pl.BlockSpec((1, FEATp), lambda m, k: (0, 0)),
            ],
            out_specs=pl.BlockSpec((tm, FEATp), lambda m, k: (m, 0)),
            scratch_shapes=[pltpu.VMEM((tm, FEATp), jnp.float32)],
        ),
        compiler_params=pltpu.CompilerParams(
            dimension_semantics=("parallel", "arbitrary")),
        cost_estimate=pl.CostEstimate(
            flops=int(2 * Bp * Kp * FEATp),
            transcendentals=0,
            bytes_accessed=int(x_pad.size * 2 + w1_pad.size * 2
                               + b1_pad.size * 4 + Bp * FEATp * 4)),
    )(x_pad, w1_pad, b1_pad)

    # --- call 2: projector over the full batch (BN needs full-batch stats) ---
    vmem = pl.BlockSpec(memory_space=pltpu.MemorySpace.VMEM)
    proj_pad = pl.pallas_call(
        functools.partial(projector_kernel, b_real=B, ph_pad=PHp, ps_pad=PSp),
        out_shape=jax.ShapeDtypeStruct((Bp, PSp), jnp.float32),
        in_specs=[vmem, vmem, vmem, vmem],
        out_specs=vmem,
        cost_estimate=pl.CostEstimate(
            flops=int(2 * Bp * FEATp * PHp + 2 * Bp * PHp * PSp),
            transcendentals=int(PHp),
            bytes_accessed=int(Bp * FEATp * 4 + FEATp * PHp * 2 + PHp * PSp * 2
                               + small.size * 4 + Bp * PSp * 4)),
    )(rep_pad, wp1_pad, wp2_pad, small)

    # Slice the lane/sublane padding away (pure layout plumbing).
    projection = proj_pad[:B, :ps]
    representation = rep_pad[:B, :feat]
    return projection, representation


# ----------------------------------------------------------------------------
# Params + pure-JAX reference (same math, same deliberate bf16 matmul inputs).
# ----------------------------------------------------------------------------
def init_params(key, in_dim, feat_dim, proj_hidden, proj_size):
    ks = jax.random.split(key, 6)
    w1 = jax.random.normal(ks[0], (in_dim, feat_dim), jnp.float32) * 0.02
    b1 = jax.random.normal(ks[1], (1, feat_dim), jnp.float32) * 0.01
    wp1 = jax.random.normal(ks[2], (feat_dim, proj_hidden), jnp.float32) * 0.1
    bp1 = jax.random.normal(ks[3], (1, proj_hidden), jnp.float32) * 0.01
    gamma = jnp.ones((1, proj_hidden), jnp.float32)   # BN weight init = 1
    beta = jnp.zeros((1, proj_hidden), jnp.float32)   # BN bias init = 0
    wp2 = jax.random.normal(ks[4], (proj_hidden, proj_size), jnp.float32) * 0.1
    bp2 = jax.random.normal(ks[5], (1, proj_size), jnp.float32) * 0.01
    return (w1, b1, wp1, bp1, gamma, beta, wp2, bp2)


def byol_reference(x_nchw, params):
    """Pure-JAX reference of the same math (matmuls use the same bf16 inputs with
    f32 accumulation as the kernels)."""
    w1, b1, wp1, bp1, gamma, beta, wp2, bp2 = params
    B = x_nchw.shape[0]
    x = x_nchw.reshape(B, -1).astype(jnp.float32)
    rep = jnp.dot(x.astype(jnp.bfloat16), w1.astype(jnp.bfloat16),
                  preferred_element_type=jnp.float32) + b1
    rep = jnp.maximum(rep, 0.0)
    h = jnp.dot(rep.astype(jnp.bfloat16), wp1.astype(jnp.bfloat16),
                preferred_element_type=jnp.float32) + bp1
    mu = jnp.mean(h, axis=0, keepdims=True)
    var = jnp.mean((h - mu) ** 2, axis=0, keepdims=True)   # biased, as torch BN
    h = (h - mu) * jax.lax.rsqrt(var + 1e-5) * gamma + beta
    h = jnp.maximum(h, 0.0)
    proj = jnp.dot(h.astype(jnp.bfloat16), wp2.astype(jnp.bfloat16),
                   preferred_element_type=jnp.float32) + bp2
    return proj, rep


if __name__ == "__main__":
    B, C, H, W = 2, 4, 16, 16          # small NCHW image batch
    FEAT_DIM = 32                      # backbone hidden (representation) width
    PROJ_HIDDEN = 64                   # BYOL projection_hidden_size (per module)
    PROJ_SIZE = 3                      # BYOL projection_size (per module)

    key = jax.random.PRNGKey(0)
    kx, kp = jax.random.split(key)
    x = jax.random.normal(kx, (B, C, H, W), jnp.float32)
    params = init_params(kp, C * H * W, FEAT_DIM, PROJ_HIDDEN, PROJ_SIZE)

    proj, rep = byol_forward(x, params)
    jax.block_until_ready((proj, rep))

    proj_ref, rep_ref = byol_reference(x, params)
    assert proj.shape == (B, PROJ_SIZE) and rep.shape == (B, FEAT_DIM)
    assert jnp.allclose(rep, rep_ref, atol=2e-4), "representation mismatch"
    assert jnp.allclose(proj, proj_ref, atol=2e-3), "projection mismatch"

    # TODO(synk): torch BatchNorm1d running-mean/var momentum buffers (training-mode
    # side effect, not part of the returned tensors) are not materialized.
    print("KERNEL_OK")
</pallas_src>

<mosaic_0001>
module attributes {stable_mosaic.version = 11 : i64} {
  func.func @backbone_kernel(%arg0: i32, %arg1: i32, %arg2: memref<8x512xbf16, #tpu.memory_space<vmem>>, %arg3: memref<512x128xbf16, #tpu.memory_space<vmem>>, %arg4: memref<1x128xf32, #tpu.memory_space<vmem>>, %arg5: memref<8x128xf32, #tpu.memory_space<vmem>>, %arg6: memref<8x128xf32, #tpu.memory_space<vmem>>) attributes {dimension_semantics = [#tpu.dimension_semantics<parallel>, #tpu.dimension_semantics<arbitrary>], iteration_bounds = array<i64: 1, 2>, scalar_prefetch = 0 : i64, scratch_operands = 1 : i64, tpu.core_type = #tpu.core_type<tc>, window_params = [{transform_indices = @transform_0, window_bounds = array<i64: 8, 512>}, {transform_indices = @transform_1, window_bounds = array<i64: 512, 128>}, {pipeline_mode = #tpu.pipeline_mode<synchronous>, transform_indices = @transform_2, window_bounds = array<i64: 1, 128>}, {transform_indices = @transform_3, window_bounds = array<i64: 8, 128>}]} {
    %c0_i32 = arith.constant 0 : i32
    %0 = arith.cmpi eq, %arg1, %c0_i32 : i32
    %1 = arith.extui %0 : i1 to i32
    %c0_i32_0 = arith.constant 0 : i32
    %2 = arith.cmpi ne, %1, %c0_i32_0 : i32
    scf.if %2 {
      %cst_9 = arith.constant 0.000000e+00 : f32
      %12 = vector.broadcast %cst_9 : f32 to vector<8x128xf32>
      %c0_10 = arith.constant 0 : index
      %c0_11 = arith.constant 0 : index
      %13 = vector.load %arg6[%c0_10, %c0_11] : memref<8x128xf32, #tpu.memory_space<vmem>>, vector<8x128xf32>
      tpu.vector_store %arg6[%c0_10, %c0_11], %12 {strides = array<i32>} : memref<8x128xf32, #tpu.memory_space<vmem>>, vector<8x128xf32>,
    } else {
    }
    %c0 = arith.constant 0 : index
    %c0_1 = arith.constant 0 : index
    %3 = vector.load %arg6[%c0, %c0_1] : memref<8x128xf32, #tpu.memory_space<vmem>>, vector<8x128xf32>
    %c0_2 = arith.constant 0 : index
    %c0_3 = arith.constant 0 : index
    %4 = vector.load %arg2[%c0_2, %c0_3] : memref<8x512xbf16, #tpu.memory_space<vmem>>, vector<8x512xbf16>
    %c0_4 = arith.constant 0 : index
    %c0_5 = arith.constant 0 : index
    %5 = vector.load %arg3[%c0_4, %c0_5] : memref<512x128xbf16, #tpu.memory_space<vmem>>, vector<512x128xbf16>
    %cst = arith.constant dense<0.000000e+00> : vector<8x128xf32>
    %6 = tpu.matmul %4, %5, %cst {dimension_numbers = #tpu.dot_dimension_numbers<[1], [0], [0], [1], [0, 0, 1, 1], [], []>} : vector<8x512xbf16>, vector<512x128xbf16>, vector<8x128xf32> -> vector<8x128xf32>
    %7 = arith.addf %3, %6 : vector<8x128xf32>
    %c0_6 = arith.constant 0 : index
    %c0_7 = arith.constant 0 : index
    %8 = vector.load %arg6[%c0_6, %c0_7] : memref<8x128xf32, #tpu.memory_space<vmem>>, vector<8x128xf32>
    tpu.vector_store %arg6[%c0_6, %c0_7], %7 {strides = array<i32>} : memref<8x128xf32, #tpu.memory_space<vmem>>, vector<8x128xf32>,
    %c1_i32 = arith.constant 1 : i32
    %9 = arith.cmpi eq, %arg1, %c1_i32 : i32
    %10 = arith.extui %9 : i1 to i32
    %c0_i32_8 = arith.constant 0 : i32
    %11 = arith.cmpi ne, %10, %c0_i32_8 : i32
    scf.if %11 {
      %c0_9 = arith.constant 0 : index
      %c0_10 = arith.constant 0 : index
      %12 = vector.load %arg6[%c0_9, %c0_10] : memref<8x128xf32, #tpu.memory_space<vmem>>, vector<8x128xf32>
      %c0_11 = arith.constant 0 : index
      %c0_12 = arith.constant 0 : index
      %13 = vector.load %arg4[%c0_11, %c0_12] : memref<1x128xf32, #tpu.memory_space<vmem>>, vector<1x128xf32>
      %14 = vector.broadcast %13 : vector<1x128xf32> to vector<8x128xf32>
      %15 = arith.addf %12, %14 : vector<8x128xf32>
      %cst_13 = arith.constant 0.000000e+00 : f32
      %16 = vector.broadcast %cst_13 : f32 to vector<8x128xf32>
      %17 = arith.maximumf %15, %16 : vector<8x128xf32>
      %c0_14 = arith.constant 0 : index
      %c0_15 = arith.constant 0 : index
      %18 = vector.load %arg5[%c0_14, %c0_15] : memref<8x128xf32, #tpu.memory_space<vmem>>, vector<8x128xf32>
      tpu.vector_store %arg5[%c0_14, %c0_15], %17 {strides = array<i32>} : memref<8x128xf32, #tpu.memory_space<vmem>>, vector<8x128xf32>,
    } else {
    }
    return
  }
  func.func @transform_0(%arg0: i32, %arg1: i32) -> (i32, i32) {
    %c0_i32 = arith.constant 0 : i32
    return %arg0, %arg1 : i32, i32
  }
  func.func @transform_1(%arg0: i32, %arg1: i32) -> (i32, i32) {
    %c0_i32 = arith.constant 0 : i32
    %c0_i32_0 = arith.constant 0 : i32
    return %arg1, %c0_i32 : i32, i32
  }
  func.func @transform_2(%arg0: i32, %arg1: i32) -> (i32, i32) {
    %c0_i32 = arith.constant 0 : i32
    %c0_i32_0 = arith.constant 0 : i32
    %c0_i32_1 = arith.constant 0 : i32
    return %c0_i32, %c0_i32_0 : i32, i32
  }
  func.func @transform_3(%arg0: i32, %arg1: i32) -> (i32, i32) {
    %c0_i32 = arith.constant 0 : i32
    %c0_i32_0 = arith.constant 0 : i32
    return %arg0, %c0_i32 : i32, i32
  }
}

</mosaic_0001>

<llo_original>
// kernel: tpu_custom_call.1
$region0: #{tpu_custom_call.1}
  #allocation0 [shape = 'u32[]', space=smem, size = 0x4, offset = 0x4, fixed_abs, tag = 'smem constant byte address 0x4 - core index']
  #allocation1 [shape = 'u32[144,128]{1,0:T(1,128)}', space=vmem, size = 0x12000, scoped, tag = 'internal scratch']
  #allocation2 [shape = 'f32[8,128]{1,0:T(8,128)}', space=vmem, size = 0x1000, scoped, tag = 'scratch operand']
  %s0 = inlined_call_operand.hbm [shape: bf16[8,1024], index: 0, kind: input, shape index: {}]
  %s1 = inlined_call_operand.hbm [shape: bf16[1024,128], index: 1, kind: input, shape index: {}]
  %s2 = inlined_call_operand.vmem [shape: f32[1,128], index: 2, kind: input, shape index: {}]
  %s3 = inlined_call_operand.hbm [shape: f32[8,128], index: 3, kind: output, shape index: {}]
  %s4 = sld [smem:[#allocation0]]
  $region61: #{tpu_custom_call.1} parent=0
    _
  %s6 = ssub.s32 1, %s4
  %s7 = scalar_select 0, %s6, %s4
  $region1: #{tpu_custom_call.1} parent=0
    #allocation3 [shape = 'u8[16384]{0}', space=vmem, size = 0x4000, scoped, tag = 'input window, operand 0']
    #allocation4 [shape = 's32[2]{0}', space=sflag, size = 0x8, scoped, tag = 'scoped memory for tpu_custom_call.1']
    #allocation5 [shape = 's32[2]{0}', space=sflag, size = 0x8, scoped, tag = 'scoped memory for tpu_custom_call.1']
    #allocation6 [shape = 'u8[262144]{0}', space=vmem, size = 0x40000, scoped, tag = 'input window, operand 1']
    #allocation7 [shape = 's32[2]{0}', space=sflag, size = 0x8, scoped, tag = 'scoped memory for tpu_custom_call.1']
    #allocation8 [shape = 'u8[4096]{0}', space=vmem, size = 0x1000, scoped, tag = 'output window, operand 0, single buffered']
    %8 = vsyncpa [#allocation4], 0
    %s9 = scalar_lea.sflag [#allocation4], 1
    %10 = vsyncpa %s9, 0
    %11 = vsyncpa [#allocation7], 0
    %s12 = scalar_lea.sflag [#allocation7], 1
    %13 = vsyncpa %s12, 0
    %14 = vsyncpa [#allocation5], 0
    loop: start=0, step=1, limit=4
    $region2: #{tpu_custom_call.1} parent=1 // loop_pre_header
      _
    $region3: #{tpu_custom_call.1} parent=1 // loop_header
      %s16 = sphi 0, %s20
      %p17 = scmp.ge.s32.totalorder %s16, 4
      %s23 = sphi 0, %s35
      %s24 = sphi 0, %s31
      %s25 = sphi 0, %s23
      %s26 = sphi 0, %s24
      %s27 = sphi 0, %s25
      %s28 = sphi 0, %s26
      %s40 = sphi 0, %s42
      %s43 = sphi 0, %s40
      %s44 = sphi 0, %s43
      %s60 = sphi 0, %s44
      %s66 = sphi 0, %s68
      %s69 = sphi 0, %s66
      %s70 = sphi 0, %s69
      %s86 = sphi 0, %s70
      %s90 = sphi 0, %s90
      %s92 = sphi 0, %s90
      %s93 = sphi 0, %s92
      %s107 = sphi 0, %s93
      %s113 = sphi 0, %s115
      %s116 = sphi 0, %s113
      %s117 = sphi 0, %s116
      %s133 = sphi 0, %s117
    $region4: #{tpu_custom_call.1} parent=1 // loop_header_branch
      %19 = sbr.rel (%p17) target = $region8
    $region5: #{tpu_custom_call.1} parent=1 // loop_body
      %s21 = ssub.s32 %s16, 1
      %s22 = ssub.s32 %s16, 2
      %s29 = sadd.s32 1, %s24
      %p30 = scmp.ge.s32.totalorder %s29, 2
      %s31 = scalar_select %p30, 0, %s29
      %s32 = sadd.s32 1, %s23
      %s33 = scalar_select %p30, %s32, %s23
      %p34 = scmp.ge.s32.totalorder %s33, 1
      %s35 = scalar_select %p34, 0, %s33
      %s36 = ssub.s32 %s23, %s35
      %s37 = ssub.s32 %s24, %s31
      %s38 = sor.u32 %s36, %s37
      %p39 = scmp.eq.s32.totalorder %s38, 0
      %s41 = sadd.s32 %s40, 1
      %s42 = scalar_select %p39, %s40, %s41
      %p45 = pneg %p39
      %p46 = scmp.eq.s32.totalorder %s16, 1
      %p47 = por %p45, %p46
      %p48 = scmp.ne.s32.totalorder %s40, %s43
      %p49 = scmp.eq.s32.totalorder %s16, 0
      %p50 = por %p48, %p49
      %p51 = scmp.ne.s32.totalorder %s40, %s43
      %p52 = scmp.eq.s32.totalorder %s21, 1
      %p53 = por %p51, %p52
      %p54 = scmp.ne.s32.totalorder %s43, %s44
      %p55 = scmp.eq.s32.totalorder %s21, 0
      %p56 = por %p54, %p55
      %p57 = scmp.ne.s32.totalorder %s43, %s44
      %p58 = scmp.eq.s32.totalorder %s22, 1
      %p59 = por %p57, %p58
      %p61 = scmp.ne.s32.totalorder %s44, %s60
      %p62 = scmp.eq.s32.totalorder %s22, 0
      %p63 = por %p61, %p62
      %s64 = ssub.s32 %s24, %s31
      %p65 = scmp.eq.s32.totalorder %s64, 0
      %s67 = sadd.s32 %s66, 1
      %s68 = scalar_select %p65, %s66, %s67
      %p71 = pneg %p65
      %p72 = scmp.eq.s32.totalorder %s16, 1
      %p73 = por %p71, %p72
      %p74 = scmp.ne.s32.totalorder %s66, %s69
      %p75 = scmp.eq.s32.totalorder %s16, 0
      %p76 = por %p74, %p75
      %p77 = scmp.ne.s32.totalorder %s66, %s69
      %p78 = scmp.eq.s32.totalorder %s21, 1
      %p79 = por %p77, %p78
      %p80 = scmp.ne.s32.totalorder %s69, %s70
      %p81 = scmp.eq.s32.totalorder %s21, 0
      %p82 = por %p80, %p81
      %p83 = scmp.ne.s32.totalorder %s69, %s70
      %p84 = scmp.eq.s32.totalorder %s22, 1
      %p85 = por %p83, %p84
      %p87 = scmp.ne.s32.totalorder %s70, %s86
      %p88 = scmp.eq.s32.totalorder %s22, 0
      %p89 = por %p87, %p88
      %s91 = sadd.s32 %s90, 1
      %p94 = scmp.eq.s32.totalorder %s16, 1
      %p95 = scmp.ne.s32.totalorder %s90, %s92
      %p96 = scmp.eq.s32.totalorder %s16, 0
      %p97 = por %p95, %p96
      %p98 = scmp.ne.s32.totalorder %s90, %s92
      %p99 = scmp.eq.s32.totalorder %s21, 1
      %p100 = por %p98, %p99
      %p101 = scmp.ne.s32.totalorder %s92, %s93
      %p102 = scmp.eq.s32.totalorder %s21, 0
      %p103 = por %p101, %p102
      %p104 = scmp.ne.s32.totalorder %s92, %s93
      %p105 = scmp.eq.s32.totalorder %s22, 1
      %p106 = por %p104, %p105
      %p108 = scmp.ne.s32.totalorder %s93, %s107
      %p109 = scmp.eq.s32.totalorder %s22, 0
      %p110 = por %p108, %p109
      %s111 = ssub.s32 %s23, %s35
      %p112 = scmp.eq.s32.totalorder %s111, 0
      %s114 = sadd.s32 %s113, 1
      %s115 = scalar_select %p112, %s113, %s114
      %p118 = pneg %p112
      %p119 = scmp.eq.s32.totalorder %s16, 1
      %p120 = por %p118, %p119
      %p121 = scmp.ne.s32.totalorder %s113, %s116
      %p122 = scmp.eq.s32.totalorder %s16, 0
      %p123 = por %p121, %p122
      %p124 = scmp.ne.s32.totalorder %s113, %s116
      %p125 = scmp.eq.s32.totalorder %s21, 1
      %p126 = por %p124, %p125
      %p127 = scmp.ne.s32.totalorder %s116, %s117
      %p128 = scmp.eq.s32.totalorder %s21, 0
      %p129 = por %p127, %p128
      %p130 = scmp.ne.s32.totalorder %s116, %s117
      %p131 = scmp.eq.s32.totalorder %s22, 1
      %p132 = por %p130, %p131
      %p134 = scmp.ne.s32.totalorder %s117, %s133
      %p135 = scmp.eq.s32.totalorder %s22, 0
      %p136 = por %p134, %p135
      %p137 = scmp.le.s32.totalorder 1, %s16
      %p138 = scmp.lt.s32.totalorder %s16, 3
      %p139 = pnand %p137, %p138
      %p140 = pneg %p139
      // Predicated region
      $region9: #{tpu_custom_call.1} parent=5 // pred_check
        _
      $region10: #{tpu_custom_call.1} parent=5 // pred_check_branch
        %142 = sbr.rel (%p139) target = $region12
      $region11: #{tpu_custom_call.1} parent=5 // pred_region
        %s143 = ssub.s32 %s16, 1
        // Predicated region
        $region13: #{tpu_custom_call.1} parent=11 // pred_check
          %p144 = pneg %p103
        $region14: #{tpu_custom_call.1} parent=11 // pred_check_branch
          %146 = sbr.rel (%p144) target = $region16
        $region15: #{tpu_custom_call.1} parent=11 // pred_region
          _
        $region16: #{tpu_custom_call.1} parent=11 // pred_fallthru
          _
      $region12: #{tpu_custom_call.1} parent=5 // pred_fallthru
        _
      %p147 = scmp.lt.s32.totalorder %s16, 2
      // Predicated region
      $region17: #{tpu_custom_call.1} parent=5 // pred_check
        %p148 = pneg %p147
      $region18: #{tpu_custom_call.1} parent=5 // pred_check_branch
        %150 = sbr.rel (%p148) target = $region20
      $region19: #{tpu_custom_call.1} parent=5 // pred_region
        // Predicated region
        $region21: #{tpu_custom_call.1} parent=19 // pred_check
          %p151 = pneg %p50
        $region22: #{tpu_custom_call.1} parent=19 // pred_check_branch
          %153 = sbr.rel (%p151) target = $region24
        $region23: #{tpu_custom_call.1} parent=19 // pred_region
          %s154 = sand.u32 %s40, 1
          %s155 = scalar_lea.sflag [#allocation4], %s154
          %s156 = sand.u32 %s40, 1
          %s157 = smul.addr %s156, 16
          %s158 = scalar_lea.vmem [#allocation3], %s157
          %s159 = smul.u32 4, %s24
          %s161 = ssub.s32 256, 256
          %162 = vsyncadd %s155, %s161
          %s163 = smul.addr %s23, 8
          %s164 = sadd.s32 %s159, %s163
          %s165 = smul.addr %s164, 64
          %s166 = scalar_lea.hbm %s0, %s165
          %s168 = sshll.u32 %s158, 4
          %s169 = int_to_ptr.vmem [resolvable:$true] %s168
          %171 = dma.hbm_to_vmem [thread:$0]  %s166, 256, %s169, %s155
        $region24: #{tpu_custom_call.1} parent=19 // pred_fallthru
          _
        // Predicated region
        $region25: #{tpu_custom_call.1} parent=19 // pred_check
          %p172 = pneg %p76
        $region26: #{tpu_custom_call.1} parent=19 // pred_check_branch
          %174 = sbr.rel (%p172) target = $region28
        $region27: #{tpu_custom_call.1} parent=19 // pred_region
          %s175 = sand.u32 %s66, 1
          %s176 = scalar_lea.sflag [#allocation7], %s175
          %s177 = sand.u32 %s66, 1
          %s178 = smul.addr %s177, 256
          %s179 = scalar_lea.vmem [#allocation6], %s178
          %s180 = smul.u32 64, %s24
          %s182 = ssub.s32 4096, 4096
          %183 = vsyncadd %s176, %s182
          %s184 = smul.addr %s180, 64
          %s185 = scalar_lea.hbm %s1, %s184
          %s186 = sshll.u32 %s179, 4
          %s187 = int_to_ptr.vmem [resolvable:$true] %s186
          %192 = dma.hbm_to_vmem [thread:$0]  %s185, 4096, %s187, %s176, 64, 64, 4
        $region28: #{tpu_custom_call.1} parent=19 // pred_fallthru
          _
      $region20: #{tpu_custom_call.1} parent=5 // pred_fallthru
        _
      %p193 = scmp.le.s32.totalorder 1, %s16
      %p194 = scmp.lt.s32.totalorder %s16, 3
      %p195 = pnand %p193, %p194
      %p196 = pneg %p195
      // Predicated region
      $region29: #{tpu_custom_call.1} parent=5 // pred_check
        _
      $region30: #{tpu_custom_call.1} parent=5 // pred_check_branch
        %198 = sbr.rel (%p195) target = $region32
      $region31: #{tpu_custom_call.1} parent=5 // pred_region
        %s199 = ssub.s32 %s16, 1
        %s200 = sand.u32 %s43, 1
        %s201 = scalar_lea.sflag [#allocation4], %s200
        %s202 = sand.u32 %s43, 1
        %s203 = smul.addr %s202, 16
        %s204 = scalar_lea.vmem [#allocation3], %s203
        // Predicated region
        $region33: #{tpu_custom_call.1} parent=31 // pred_check
          %p205 = pneg %p56
        $region34: #{tpu_custom_call.1} parent=31 // pred_check_branch
          %207 = sbr.rel (%p205) target = $region36
        $region35: #{tpu_custom_call.1} parent=31 // pred_region
          %208 = dma.done %s201, 256
        $region36: #{tpu_custom_call.1} parent=31 // pred_fallthru
          _
        %s209 = sand.u32 %s69, 1
        %s210 = scalar_lea.sflag [#allocation7], %s209
        %s211 = sand.u32 %s69, 1
        %s212 = smul.addr %s211, 256
        %s213 = scalar_lea.vmem [#allocation6], %s212
        // Predicated region
        $region37: #{tpu_custom_call.1} parent=31 // pred_check
          %p214 = pneg %p82
        $region38: #{tpu_custom_call.1} parent=31 // pred_check_branch
          %216 = sbr.rel (%p214) target = $region40
        $region39: #{tpu_custom_call.1} parent=31 // pred_region
          %217 = dma.done %s210, 4096
        $region40: #{tpu_custom_call.1} parent=31 // pred_fallthru
          _
        %s218 = sand.u32 %s43, 1
        %s219 = scalar_lea.sflag [#allocation4], %s218
        %s220 = sand.u32 %s43, 1
        %s221 = smul.addr %s220, 16
        %s222 = scalar_lea.vmem [#allocation3], %s221
        %p223 = pneg %p56
        %p224 = pneg %p53
        %s225 = sand.u32 %s69, 1
        %s226 = scalar_lea.sflag [#allocation7], %s225
        %s227 = sand.u32 %s69, 1
        %s228 = smul.addr %s227, 256
        %s229 = scalar_lea.vmem [#allocation6], %s228
        %p230 = pneg %p82
        %p231 = pneg %p79
        %p232 = pneg %p103
        %p233 = pneg %p100
        %p234 = pneg %p129
        %p235 = pneg %p126
        %s236 = smul.u32 4, %s26
        %s237 = smul.u32 64, %s26
        %p239 = scmp.eq.s32.totalorder %s26, 0
        // Predicated region
        $region41: #{tpu_custom_call.1} parent=31 // pred_check
          %p240 = pneg %p239
        $region42: #{tpu_custom_call.1} parent=31 // pred_check_branch
          %242 = sbr.rel (%p240) target = $region44
        $region43: #{tpu_custom_call.1} parent=31 // pred_region
          %243 = vst [vmem:[#allocation2] sm:$0xff] 0.0
        $region44: #{tpu_custom_call.1} parent=31 // pred_fallthru
          _
        %v244 = vld [vmem:[#allocation2] sm:$0xff]
        %v245 = vld [vmem:[%s204] sm:$0xff]
        %v246 = vld [vmem:[%s204 + $0x8] sm:$0xff]
        %v247 = vld [vmem:[%s213] sm:$0xf]
        %v248 = vld [vmem:[%s213 + $0x4] sm:$0xf]
        %v249 = vld [vmem:[%s213 + $0x8] sm:$0xf]
        %v250 = vld [vmem:[%s213 + $0xc] sm:$0xf]
        %v251 = vld [vmem:[%s213 + $0x10] sm:$0xf]
        %v252 = vld [vmem:[%s213 + $0x14] sm:$0xf]
        %v253 = vld [vmem:[%s213 + $0x18] sm:$0xf]
        %v254 = vld [vmem:[%s213 + $0x1c] sm:$0xf]
        %v255 = vld [vmem:[%s213 + $0x20] sm:$0xf]
        %v256 = vld [vmem:[%s213 + $0x24] sm:$0xf]
        %v257 = vld [vmem:[%s213 + $0x28] sm:$0xf]
        %v258 = vld [vmem:[%s213 + $0x2c] sm:$0xf]
        %v259 = vld [vmem:[%s213 + $0x30] sm:$0xf]
        %v260 = vld [vmem:[%s213 + $0x34] sm:$0xf]
        %v261 = vld [vmem:[%s213 + $0x38] sm:$0xf]
        %v262 = vld [vmem:[%s213 + $0x3c] sm:$0xf]
        %v263 = vld [vmem:[%s213 + $0x40] sm:$0xf]
        %v264 = vld [vmem:[%s213 + $0x44] sm:$0xf]
        %v265 = vld [vmem:[%s213 + $0x48] sm:$0xf]
        %v266 = vld [vmem:[%s213 + $0x4c] sm:$0xf]
        %v267 = vld [vmem:[%s213 + $0x50] sm:$0xf]
        %v268 = vld [vmem:[%s213 + $0x54] sm:$0xf]
        %v269 = vld [vmem:[%s213 + $0x58] sm:$0xf]
        %v270 = vld [vmem:[%s213 + $0x5c] sm:$0xf]
        %v271 = vld [vmem:[%s213 + $0x60] sm:$0xf]
        %v272 = vld [vmem:[%s213 + $0x64] sm:$0xf]
        %v273 = vld [vmem:[%s213 + $0x68] sm:$0xf]
        %v274 = vld [vmem:[%s213 + $0x6c] sm:$0xf]
        %v275 = vld [vmem:[%s213 + $0x70] sm:$0xf]
        %v276 = vld [vmem:[%s213 + $0x74] sm:$0xf]
        %v277 = vld [vmem:[%s213 + $0x78] sm:$0xf]
        %v278 = vld [vmem:[%s213 + $0x7c] sm:$0xf]
        %v279 = vld [vmem:[%s213 + $0x80] sm:$0xf]
        %v280 = vld [vmem:[%s213 + $0x84] sm:$0xf]
        %v281 = vld [vmem:[%s213 + $0x88] sm:$0xf]
        %v282 = vld [vmem:[%s213 + $0x8c] sm:$0xf]
        %v283 = vld [vmem:[%s213 + $0x90] sm:$0xf]
        %v284 = vld [vmem:[%s213 + $0x94] sm:$0xf]
        %v285 = vld [vmem:[%s213 + $0x98] sm:$0xf]
        %v286 = vld [vmem:[%s213 + $0x9c] sm:$0xf]
        %v287 = vld [vmem:[%s213 + $0xa0] sm:$0xf]
        %v288 = vld [vmem:[%s213 + $0xa4] sm:$0xf]
        %v289 = vld [vmem:[%s213 + $0xa8] sm:$0xf]
        %v290 = vld [vmem:[%s213 + $0xac] sm:$0xf]
        %v291 = vld [vmem:[%s213 + $0xb0] sm:$0xf]
        %v292 = vld [vmem:[%s213 + $0xb4] sm:$0xf]
        %v293 = vld [vmem:[%s213 + $0xb8] sm:$0xf]
        %v294 = vld [vmem:[%s213 + $0xbc] sm:$0xf]
        %v295 = vld [vmem:[%s213 + $0xc0] sm:$0xf]
        %v296 = vld [vmem:[%s213 + $0xc4] sm:$0xf]
        %v297 = vld [vmem:[%s213 + $0xc8] sm:$0xf]
        %v298 = vld [vmem:[%s213 + $0xcc] sm:$0xf]
        %v299 = vld [vmem:[%s213 + $0xd0] sm:$0xf]
        %v300 = vld [vmem:[%s213 + $0xd4] sm:$0xf]
        %v301 = vld [vmem:[%s213 + $0xd8] sm:$0xf]
        %v302 = vld [vmem:[%s213 + $0xdc] sm:$0xf]
        %v303 = vld [vmem:[%s213 + $0xe0] sm:$0xf]
        %v304 = vld [vmem:[%s213 + $0xe4] sm:$0xf]
        %v305 = vld [vmem:[%s213 + $0xe8] sm:$0xf]
        %v306 = vld [vmem:[%s213 + $0xec] sm:$0xf]
        %v307 = vld [vmem:[%s213 + $0xf0] sm:$0xf]
        %v308 = vld [vmem:[%s213 + $0xf4] sm:$0xf]
        %v309 = vld [vmem:[%s213 + $0xf8] sm:$0xf]
        %v310 = vld [vmem:[%s213 + $0xfc] sm:$0xf]
        %v313 = vunpack.c.l.b16 %v245
        %v314 = vunpack.c.h.b16 %v245
        %v315 = vunpack.c.l.b16 %v246
        %v316 = vunpack.c.h.b16 %v246
        %v317 = vpack.c.b16 %v313, %v313
        %v318 = vpack.c.b16 %v314, %v314
        %v319 = vpack.c.b16 %v315, %v315
        %v320 = vpack.c.b16 %v316, %v316
        %v389 = vunpack.c.l.b16 %v247
        %v390 = vunpack.c.l.b16 %v248
        %v391 = vunpack.c.l.b16 %v249
        %v392 = vunpack.c.l.b16 %v250
        %v393 = vunpack.c.l.b16 %v251
        %v394 = vunpack.c.l.b16 %v252
        %v395 = vunpack.c.l.b16 %v253
        %v396 = vunpack.c.l.b16 %v254
        %v397 = vunpack.c.l.b16 %v255
        %v398 = vunpack.c.l.b16 %v256
        %v399 = vunpack.c.l.b16 %v257
        %v400 = vunpack.c.l.b16 %v258
        %v401 = vunpack.c.l.b16 %v259
        %v402 = vunpack.c.l.b16 %v260
        %v403 = vunpack.c.l.b16 %v261
        %v404 = vunpack.c.l.b16 %v262
        %v405 = vunpack.c.l.b16 %v263
        %v406 = vunpack.c.l.b16 %v264
        %v407 = vunpack.c.l.b16 %v265
        %v408 = vunpack.c.l.b16 %v266
        %v409 = vunpack.c.l.b16 %v267
        %v410 = vunpack.c.l.b16 %v268
        %v411 = vunpack.c.l.b16 %v269
        %v412 = vunpack.c.l.b16 %v270
        %v413 = vunpack.c.l.b16 %v271
        %v414 = vunpack.c.l.b16 %v272
        %v415 = vunpack.c.l.b16 %v273
        %v416 = vunpack.c.l.b16 %v274
        %v417 = vunpack.c.l.b16 %v275
        %v418 = vunpack.c.l.b16 %v276
        %v419 = vunpack.c.l.b16 %v277
        %v420 = vunpack.c.l.b16 %v278
        %v421 = vunpack.c.l.b16 %v279
        %v422 = vunpack.c.l.b16 %v280
        %v423 = vunpack.c.l.b16 %v281
        %v424 = vunpack.c.l.b16 %v282
        %v425 = vunpack.c.l.b16 %v283
        %v426 = vunpack.c.l.b16 %v284
        %v427 = vunpack.c.l.b16 %v285
        %v428 = vunpack.c.l.b16 %v286
        %v429 = vunpack.c.l.b16 %v287
        %v430 = vunpack.c.l.b16 %v288
        %v431 = vunpack.c.l.b16 %v289
        %v432 = vunpack.c.l.b16 %v290
        %v433 = vunpack.c.l.b16 %v291
        %v434 = vunpack.c.l.b16 %v292
        %v435 = vunpack.c.l.b16 %v293
        %v436 = vunpack.c.l.b16 %v294
        %v437 = vunpack.c.l.b16 %v295
        %v438 = vunpack.c.l.b16 %v296
        %v439 = vunpack.c.l.b16 %v297
        %v440 = vunpack.c.l.b16 %v298
        %v441 = vunpack.c.l.b16 %v299
        %v442 = vunpack.c.l.b16 %v300
        %v443 = vunpack.c.l.b16 %v301
        %v444 = vunpack.c.l.b16 %v302
        %v445 = vunpack.c.l.b16 %v303
        %v446 = vunpack.c.l.b16 %v304
        %v447 = vunpack.c.l.b16 %v305
        %v448 = vunpack.c.l.b16 %v306
        %v449 = vunpack.c.l.b16 %v307
        %v450 = vunpack.c.l.b16 %v308
        %v451 = vunpack.c.l.b16 %v309
        %v452 = vunpack.c.l.b16 %v310
        %v453 = vpack.c.b16 %v390, %v389
        %v454 = vpack.c.b16 %v392, %v391
        %v455 = vpack.c.b16 %v394, %v393
        %v456 = vpack.c.b16 %v396, %v395
        %v457 = vpack.c.b16 %v398, %v397
        %v458 = vpack.c.b16 %v400, %v399
        %v459 = vpack.c.b16 %v402, %v401
        %v460 = vpack.c.b16 %v404, %v403
        %v461 = vpack.c.b16 %v406, %v405
        %v462 = vpack.c.b16 %v408, %v407
        %v463 = vpack.c.b16 %v410, %v409
        %v464 = vpack.c.b16 %v412, %v411
        %v465 = vpack.c.b16 %v414, %v413
        %v466 = vpack.c.b16 %v416, %v415
        %v467 = vpack.c.b16 %v418, %v417
        %v468 = vpack.c.b16 %v420, %v419
        %v469 = vpack.c.b16 %v422, %v421
        %v470 = vpack.c.b16 %v424, %v423
        %v471 = vpack.c.b16 %v426, %v425
        %v472 = vpack.c.b16 %v428, %v427
        %v473 = vpack.c.b16 %v430, %v429
        %v474 = vpack.c.b16 %v432, %v431
        %v475 = vpack.c.b16 %v434, %v433
        %v476 = vpack.c.b16 %v436, %v435
        %v477 = vpack.c.b16 %v438, %v437
        %v478 = vpack.c.b16 %v440, %v439
        %v479 = vpack.c.b16 %v442, %v441
        %v480 = vpack.c.b16 %v444, %v443
        %v481 = vpack.c.b16 %v446, %v445
        %v482 = vpack.c.b16 %v448, %v447
        %v483 = vpack.c.b16 %v450, %v449
        %v484 = vpack.c.b16 %v452, %v451
        %517 = vmatprep.subr.bf16.mxu0 0
        %518 = vmatpush1.bf16.msra.mxu0 %v453
        %519 = vmatprep.subr.bf16.mxu0 0
        %520 = vmatpush1.bf16.msra.mxu0 %v454
        %521 = vmatprep.subr.bf16.mxu0 0
        %522 = vmatpush1.bf16.msra.mxu0 %v455
        %523 = vmatprep.subr.bf16.mxu0 0
        %524 = vmatpush1.bf16.msra.mxu0 %v456
        %525 = vmatprep.subr.bf16.mxu0 0
        %526 = vmatpush1.bf16.msra.mxu0 %v457
        %527 = vmatprep.subr.bf16.mxu0 0
        %528 = vmatpush1.bf16.msra.mxu0 %v458
        %529 = vmatprep.subr.bf16.mxu0 0
        %530 = vmatpush1.bf16.msra.mxu0 %v459
        %531 = vmatprep.subr.bf16.mxu0 0
        %532 = vmatpush1.bf16.msra.mxu0 %v460
        %533 = vmatprep.subr.bf16.mxu0 0
        %534 = vmatpush1.bf16.msra.mxu0 %v461
        %535 = vmatprep.subr.bf16.mxu0 0
        %536 = vmatpush1.bf16.msra.mxu0 %v462
        %537 = vmatprep.subr.bf16.mxu0 0
        %538 = vmatpush1.bf16.msra.mxu0 %v463
        %539 = vmatprep.subr.bf16.mxu0 0
        %540 = vmatpush1.bf16.msra.mxu0 %v464
        %541 = vmatprep.subr.bf16.mxu0 0
        %542 = vmatpush1.bf16.msra.mxu0 %v465
        %543 = vmatprep.subr.bf16.mxu0 0
        %544 = vmatpush1.bf16.msra.mxu0 %v466
        %545 = vmatprep.subr.bf16.mxu0 0
        %546 = vmatpush1.bf16.msra.mxu0 %v467
        %547 = vmatprep.subr.bf16.mxu0 0
        %548 = vmatpush1.bf16.msra.mxu0 %v468
        %549 = vmatprep.mubr.bf16.mxu0 %v318
        %550 = vmatmul.mubr.bf16.gmra.mrb[0].mxu0 %v317
        %v551 = vpop.f32.mrb[0].mxu0
        %v552 = vadd.f32 0.0, %v551
        %v553 = vpop.f32.mrb[0].mxu0
        %v554 = vpop.f32.mrb[0].mxu0
        %v555 = vpop.f32.mrb[0].mxu0
        %556 = vdwg.mxu0
        %557 = vmatprep.subr.bf16.mxu0 0
        %558 = vmatpush1.bf16.msra.mxu0 %v469
        %559 = vmatprep.subr.bf16.mxu0 0
        %560 = vmatpush1.bf16.msra.mxu0 %v470
        %561 = vmatprep.subr.bf16.mxu0 0
        %562 = vmatpush1.bf16.msra.mxu0 %v471
        %563 = vmatprep.subr.bf16.mxu0 0
        %564 = vmatpush1.bf16.msra.mxu0 %v472
        %565 = vmatprep.subr.bf16.mxu0 0
        %566 = vmatpush1.bf16.msra.mxu0 %v473
        %567 = vmatprep.subr.bf16.mxu0 0
        %568 = vmatpush1.bf16.msra.mxu0 %v474
        %569 = vmatprep.subr.bf16.mxu0 0
        %570 = vmatpush1.bf16.msra.mxu0 %v475
        %571 = vmatprep.subr.bf16.mxu0 0
        %572 = vmatpush1.bf16.msra.mxu0 %v476
        %573 = vmatprep.subr.bf16.mxu0 0
        %574 = vmatpush1.bf16.msra.mxu0 %v477
        %575 = vmatprep.subr.bf16.mxu0 0
        %576 = vmatpush1.bf16.msra.mxu0 %v478
        %577 = vmatprep.subr.bf16.mxu0 0
        %578 = vmatpush1.bf16.msra.mxu0 %v479
        %579 = vmatprep.subr.bf16.mxu0 0
        %580 = vmatpush1.bf16.msra.mxu0 %v480
        %581 = vmatprep.subr.bf16.mxu0 0
        %582 = vmatpush1.bf16.msra.mxu0 %v481
        %583 = vmatprep.subr.bf16.mxu0 0
        %584 = vmatpush1.bf16.msra.mxu0 %v482
        %585 = vmatprep.subr.bf16.mxu0 0
        %586 = vmatpush1.bf16.msra.mxu0 %v483
        %587 = vmatprep.subr.bf16.mxu0 0
        %588 = vmatpush1.bf16.msra.mxu0 %v484
        %589 = vmatprep.mubr.bf16.mxu0 %v320
        %590 = vmatmul.mubr.bf16.gmra.mrb[0].mxu0 %v319
        %v591 = vpop.f32.mrb[0].mxu0
        %v592 = vadd.f32 %v552, %v591
        %v593 = vpop.f32.mrb[0].mxu0
        %v594 = vpop.f32.mrb[0].mxu0
        %v595 = vpop.f32.mrb[0].mxu0
        %596 = vdwg.mxu0
        %v597 = vadd.f32 %v244, %v592
        %598 = vst [vmem:[#allocation2] sm:$0xff] %v597
        %p599 = scmp.eq.s32.totalorder %s26, 1
        // Predicated region
        $region45: #{tpu_custom_call.1} parent=31 // pred_check
          %p600 = pneg %p599
        $region46: #{tpu_custom_call.1} parent=31 // pred_check_branch
          %602 = sbr.rel (%p600) target = $region48
        $region47: #{tpu_custom_call.1} parent=31 // pred_region
          %v603 = vld [vmem:[#allocation2] sm:$0xff]
          %v604 = vld [vmem:[%s2] sm:$0x1]
          %v606 = vlaneseq
          %v607 = vshrl.u32 %v606, 7
          %v608 = vsub.s32 0, %v607
          %v609 = vrot.slane %v604, %v608
          %v611 = vadd.f32 %v603, %v609
          %v612 = vmax.f32 %v611, 0.0
          %613 = vst [vmem:[#allocation8] sm:$0xff] %v612
        $region48: #{tpu_custom_call.1} parent=31 // pred_fallthru
          _
        // Predicated region
        $region49: #{tpu_custom_call.1} parent=31 // pred_check
          %p614 = pneg %p126
        $region50: #{tpu_custom_call.1} parent=31 // pred_check_branch
          %616 = sbr.rel (%p614) target = $region52
        $region51: #{tpu_custom_call.1} parent=31 // pred_region
          %s618 = ssub.s32 128, 128
          %619 = vsyncadd [#allocation5], %s618
          %s620 = smul.addr %s25, 128
          %s621 = scalar_lea.hbm %s3, %s620
          %s623 = sshll.u32 [#allocation8], 4
          %s624 = int_to_ptr.vmem [resolvable:$true] %s623
          %626 = dma.vmem_to_hbm [thread:$0]  %s624, 128, %s621, [#allocation5]
        $region52: #{tpu_custom_call.1} parent=31 // pred_fallthru
          _
        // Predicated region
        $region53: #{tpu_custom_call.1} parent=31 // pred_check
          %p627 = pneg %p126
        $region54: #{tpu_custom_call.1} parent=31 // pred_check_branch
          %629 = sbr.rel (%p627) target = $region56
        $region55: #{tpu_custom_call.1} parent=31 // pred_region
          %630 = dma.done [#allocation5], 128
        $region56: #{tpu_custom_call.1} parent=31 // pred_fallthru
          _
      $region32: #{tpu_custom_call.1} parent=5 // pred_fallthru
        _
      %p631 = scmp.le.s32.totalorder 2, %s16
      // Predicated region
      $region57: #{tpu_custom_call.1} parent=5 // pred_check
        %p632 = pneg %p631
      $region58: #{tpu_custom_call.1} parent=5 // pred_check_branch
        %634 = sbr.rel (%p632) target = $region60
      $region59: #{tpu_custom_call.1} parent=5 // pred_region
        %s635 = ssub.s32 %s16, 2
      $region60: #{tpu_custom_call.1} parent=5 // pred_fallthru
        _
    $region6: #{tpu_custom_call.1} parent=1 // loop_footer
      %s20 = sadd.s32 1, %s16
    $region7: #{tpu_custom_call.1} parent=1 // loop_footer_branch
      %15 = sbr.rel target = $region3
    $region8: #{tpu_custom_call.1} parent=1 // loop_exit
      _
    %636 = vsyncpa [#allocation4], 1
    %s637 = scalar_lea.sflag [#allocation4], 1
    %638 = vsyncpa %s637, 1
    %639 = vsyncpa [#allocation7], 1
    %s640 = scalar_lea.sflag [#allocation7], 1
    %641 = vsyncpa %s640, 1
    %642 = vsyncpa [#allocation5], 1
    %s643 = scalar_lea.sflag [#allocation5], 1
    %644 = vsyncpa %s643, 1

</llo_original>
